<compile_context>
chip_gen: v6e
topology: v6e:2x2x1
jax: 0.10.0
libtpu: 0.0.40
codegen_flags: <defaults>
</compile_context>

<pallas_src>
import functools

import jax
import jax.numpy as jnp
from jax.experimental import pallas as pl
from jax.experimental.pallas import tpu as pltpu

_LANES = 128
# (1024, 128) f32 block = 512 KiB; x2 double-buffer x (in + out) = 2 MiB VMEM.
_MAX_TILE_ROWS = 1024


def _fmix32(h):
    """murmur3 32-bit finalizer (strong avalanche on sequential counters)."""
    h = h ^ (h >> jnp.uint32(16))
    h = h * jnp.uint32(0x85EBCA6B)
    h = h ^ (h >> jnp.uint32(13))
    h = h * jnp.uint32(0xC2B2AE35)
    h = h ^ (h >> jnp.uint32(16))
    return h


def _erfinv_f32(x):
    """Giles' single-precision erfinv approximation (polynomials + log/sqrt only)."""
    w = -jnp.log((1.0 - x) * (1.0 + x))
    # central branch (w < 5)
    wc = w - 2.5
    pc = jnp.float32(2.81022636e-08)
    pc = 3.43273939e-07 + pc * wc
    pc = -3.5233877e-06 + pc * wc
    pc = -4.39150654e-06 + pc * wc
    pc = 0.00021858087 + pc * wc
    pc = -0.00125372503 + pc * wc
    pc = -0.00417768164 + pc * wc
    pc = 0.246640727 + pc * wc
    pc = 1.50140941 + pc * wc
    # tail branch (w >= 5)
    wt = jnp.sqrt(w) - 3.0
    pt = jnp.float32(-0.000200214257)
    pt = 0.000100950558 + pt * wt
    pt = 0.00134934322 + pt * wt
    pt = -0.00367342844 + pt * wt
    pt = 0.00573950773 + pt * wt
    pt = -0.0076224613 + pt * wt
    pt = 0.00943887047 + pt * wt
    pt = 1.00167406 + pt * wt
    pt = 2.83297682 + pt * wt
    return jnp.where(w < 5.0, pc, pt) * x


def _gaussian_noise_kernel(seed_ref, x_ref, o_ref, *, sigma):
    # seed_ref: SMEM (1,) int32 (scalar prefetch); x_ref/o_ref: VMEM (tile_rows, 128).
    nrows, nlanes = x_ref.shape
    i = pl.program_id(0)

    # Global element index of every element in this tile -> counter-based PRNG:
    # every tile / element gets an independent draw by construction.
    row = jax.lax.broadcasted_iota(jnp.int32, (nrows, nlanes), 0)
    lane = jax.lax.broadcasted_iota(jnp.int32, (nrows, nlanes), 1)
    ctr = ((i * nrows + row) * nlanes + lane).astype(jnp.uint32)

    seed_u = seed_ref[0].astype(jnp.uint32)
    h = _fmix32((ctr * jnp.uint32(0x9E3779B9)) + seed_u)
    h = _fmix32(h ^ (seed_u * jnp.uint32(0x85EBCA6B) + jnp.uint32(0x7F4A7C15)))

    # 24 random bits -> symmetric uniform in (-1, 1), never hitting +/-1 exactly.
    u24 = (h >> jnp.uint32(8)).astype(jnp.int32).astype(jnp.float32)
    sym = (u24 - 8388607.5) * jnp.float32(1.0 / 8388608.0)

    # Standard normal via inverse CDF: Phi^{-1}(u) = sqrt(2) * erfinv(2u - 1).
    noise = jnp.float32(1.4142135623730951) * _erfinv_f32(sym)

    # out = x + sigma * x * noise = x * (1 + sigma * noise).
    # Compute in f32 (HBM traffic stays in the native dtype either way).
    xf = x_ref[...].astype(jnp.float32)
    o_ref[...] = (xf * (1.0 + jnp.float32(sigma) * noise)).astype(o_ref.dtype)


def gaussian_noise(x, seed, *, sigma=0.1, training=True):
    """Pallas implementation of GaussianNoise.forward (forward pass only)."""
    if (not training) or sigma == 0:
        return x  # identity path, matches the PyTorch module exactly

    orig_shape = x.shape
    orig_dtype = x.dtype
    total = x.size

    rows = -(-total // _LANES)          # ceil(total / 128)
    pad = rows * _LANES - total         # only the final (<128-elem) row needs padding

    flat = x.reshape(-1)                # contiguous reshape: free
    if pad:
        flat = jnp.pad(flat, (0, pad))
    x2d = flat.reshape(rows, _LANES)

    # Sublane-aligned tile, clamped so tiny inputs don't over-allocate VMEM.
    tile_rows = min(_MAX_TILE_ROWS, -(-rows // 8) * 8)
    grid = (pl.cdiv(rows, tile_rows),)

    seed_arr = jnp.asarray([seed], dtype=jnp.int32)

    # NOTE: input_output_aliases={1: 0} (alias x2d -> out) would halve peak HBM
    # footprint inside a jitted training step with donated activations; it is
    # left off here because this eager test script still reads `x` afterwards.
    out2d = pl.pallas_call(
        functools.partial(_gaussian_noise_kernel, sigma=float(sigma)),
        out_shape=jax.ShapeDtypeStruct((rows, _LANES), orig_dtype),
        grid_spec=pltpu.PrefetchScalarGridSpec(
            num_scalar_prefetch=1,
            grid=grid,
            in_specs=[pl.BlockSpec((tile_rows, _LANES), lambda i, sref: (i, 0))],
            out_specs=pl.BlockSpec((tile_rows, _LANES), lambda i, sref: (i, 0)),
        ),
        compiler_params=pltpu.CompilerParams(
            dimension_semantics=("parallel",),  # shard row blocks across v7x's 2 TCs
        ),
    )(seed_arr, x2d)

    out_flat = out2d.reshape(-1)
    if pad:
        out_flat = out_flat[:total]
    return out_flat.reshape(orig_shape)


if __name__ == "__main__":
    key = jax.random.PRNGKey(0)
    # NCHW input, small shape consistent with a conv-net activation.
    x = jax.random.normal(key, (2, 4, 16, 16), dtype=jnp.float32)

    sigma = 0.1
    out = jax.block_until_ready(gaussian_noise(x, seed=0, sigma=sigma, training=True))

    # Shape/dtype preserved; implied noise is ~N(0, 1).
    assert out.shape == x.shape and out.dtype == x.dtype
    implied_noise = (out - x) / (sigma * jnp.where(x == 0, 1.0, x))
    m = float(jnp.mean(implied_noise))
    s = float(jnp.std(implied_noise))
    assert abs(m) < 0.2 and 0.7 < s < 1.3, (m, s)

    # Eval mode must be the identity.
    out_eval = jax.block_until_ready(gaussian_noise(x, seed=0, sigma=sigma, training=False))
    assert bool(jnp.all(out_eval == x))

    # Exercise the lane-padding path with a non-multiple-of-128 size.
    x_odd = jax.random.normal(jax.random.PRNGKey(1), (3, 5, 7), dtype=jnp.float32)
    out_odd = jax.block_until_ready(gaussian_noise(x_odd, seed=7, sigma=sigma, training=True))
    assert out_odd.shape == x_odd.shape and out_odd.dtype == x_odd.dtype
    assert bool(jnp.all(jnp.isfinite(out_odd)))
    assert not bool(jnp.all(out_odd == x_odd))

    print("KERNEL_OK")
</pallas_src>

<mosaic_0001>
module attributes {stable_mosaic.version = 11 : i64} {
  func.func @_gaussian_noise_kernel(%arg0: i32, %arg1: memref<1xi32, #tpu.memory_space<smem>>, %arg2: memref<16x128xf32, #tpu.memory_space<vmem>>, %arg3: memref<16x128xf32, #tpu.memory_space<vmem>>) attributes {dimension_semantics = [#tpu.dimension_semantics<parallel>], iteration_bounds = array<i64: 1>, scalar_prefetch = 1 : i64, scratch_operands = 0 : i64, tpu.core_type = #tpu.core_type<tc>, window_params = [{transform_indices = @transform_0, window_bounds = array<i64: 16, 128>}, {transform_indices = @transform_1, window_bounds = array<i64: 16, 128>}]} {
    %0 = tpu.iota {dimensions = array<i32: 0>} : vector<16x128xi32>
    %1 = tpu.iota {dimensions = array<i32: 1>} : vector<16x128xi32>
    %c16_i32 = arith.constant 16 : i32
    %2 = arith.muli %arg0, %c16_i32 : i32
    %3 = vector.broadcast %2 : i32 to vector<16x128xi32>
    %4 = arith.addi %3, %0 : vector<16x128xi32>
    %c128_i32 = arith.constant 128 : i32
    %5 = vector.broadcast %c128_i32 : i32 to vector<16x128xi32>
    %6 = arith.muli %4, %5 : vector<16x128xi32>
    %7 = arith.addi %6, %1 : vector<16x128xi32>
    %c0 = arith.constant 0 : index
    %8 = memref.load %arg1[%c0] : memref<1xi32, #tpu.memory_space<smem>>
    %c-1640531527_i32 = arith.constant -1640531527 : i32
    %9 = vector.broadcast %c-1640531527_i32 : i32 to vector<16x128xi32>
    %10 = arith.muli %7, %9 : vector<16x128xi32>
    %11 = vector.broadcast %8 : i32 to vector<16x128xi32>
    %12 = arith.addi %10, %11 : vector<16x128xi32>
    %c16_i32_0 = arith.constant 16 : i32
    %13 = vector.broadcast %c16_i32_0 : i32 to vector<16x128xi32>
    %14 = arith.shrui %12, %13 : vector<16x128xi32>
    %15 = arith.xori %12, %14 : vector<16x128xi32>
    %c-2048144789_i32 = arith.constant -2048144789 : i32
    %16 = vector.broadcast %c-2048144789_i32 : i32 to vector<16x128xi32>
    %17 = arith.muli %15, %16 : vector<16x128xi32>
    %c13_i32 = arith.constant 13 : i32
    %18 = vector.broadcast %c13_i32 : i32 to vector<16x128xi32>
    %19 = arith.shrui %17, %18 : vector<16x128xi32>
    %20 = arith.xori %17, %19 : vector<16x128xi32>
    %c-1028477387_i32 = arith.constant -1028477387 : i32
    %21 = vector.broadcast %c-1028477387_i32 : i32 to vector<16x128xi32>
    %22 = arith.muli %20, %21 : vector<16x128xi32>
    %c16_i32_1 = arith.constant 16 : i32
    %23 = vector.broadcast %c16_i32_1 : i32 to vector<16x128xi32>
    %24 = arith.shrui %22, %23 : vector<16x128xi32>
    %25 = arith.xori %22, %24 : vector<16x128xi32>
    %c-2048144789_i32_2 = arith.constant -2048144789 : i32
    %26 = arith.muli %8, %c-2048144789_i32_2 : i32
    %c2135587861_i32 = arith.constant 2135587861 : i32
    %27 = arith.addi %26, %c2135587861_i32 : i32
    %28 = vector.broadcast %27 : i32 to vector<16x128xi32>
    %29 = arith.xori %25, %28 : vector<16x128xi32>
    %c16_i32_3 = arith.constant 16 : i32
    %30 = vector.broadcast %c16_i32_3 : i32 to vector<16x128xi32>
    %31 = arith.shrui %29, %30 : vector<16x128xi32>
    %32 = arith.xori %29, %31 : vector<16x128xi32>
    %c-2048144789_i32_4 = arith.constant -2048144789 : i32
    %33 = vector.broadcast %c-2048144789_i32_4 : i32 to vector<16x128xi32>
    %34 = arith.muli %32, %33 : vector<16x128xi32>
    %c13_i32_5 = arith.constant 13 : i32
    %35 = vector.broadcast %c13_i32_5 : i32 to vector<16x128xi32>
    %36 = arith.shrui %34, %35 : vector<16x128xi32>
    %37 = arith.xori %34, %36 : vector<16x128xi32>
    %c-1028477387_i32_6 = arith.constant -1028477387 : i32
    %38 = vector.broadcast %c-1028477387_i32_6 : i32 to vector<16x128xi32>
    %39 = arith.muli %37, %38 : vector<16x128xi32>
    %c16_i32_7 = arith.constant 16 : i32
    %40 = vector.broadcast %c16_i32_7 : i32 to vector<16x128xi32>
    %41 = arith.shrui %39, %40 : vector<16x128xi32>
    %42 = arith.xori %39, %41 : vector<16x128xi32>
    %c8_i32 = arith.constant 8 : i32
    %43 = vector.broadcast %c8_i32 : i32 to vector<16x128xi32>
    %44 = arith.shrui %42, %43 : vector<16x128xi32>
    %45 = arith.sitofp %44 : vector<16x128xi32> to vector<16x128xf32>
    %cst = arith.constant 8388607.5 : f32
    %46 = vector.broadcast %cst : f32 to vector<16x128xf32>
    %47 = arith.subf %45, %46 : vector<16x128xf32>
    %cst_8 = arith.constant 1.1920929E-7 : f32
    %48 = vector.broadcast %cst_8 : f32 to vector<16x128xf32>
    %49 = arith.mulf %47, %48 : vector<16x128xf32>
    %cst_9 = arith.constant 1.000000e+00 : f32
    %50 = vector.broadcast %cst_9 : f32 to vector<16x128xf32>
    %51 = arith.subf %50, %49 : vector<16x128xf32>
    %cst_10 = arith.constant 1.000000e+00 : f32
    %52 = vector.broadcast %cst_10 : f32 to vector<16x128xf32>
    %53 = arith.addf %52, %49 : vector<16x128xf32>
    %54 = arith.mulf %51, %53 : vector<16x128xf32>
    %55 = math.log %54 : vector<16x128xf32>
    %cst_11 = arith.constant 0.000000e+00 : f32
    %56 = vector.broadcast %cst_11 : f32 to vector<16x128xf32>
    %57 = arith.subf %56, %55 : vector<16x128xf32>
    %cst_12 = arith.constant 2.500000e+00 : f32
    %58 = vector.broadcast %cst_12 : f32 to vector<16x128xf32>
    %59 = arith.subf %57, %58 : vector<16x128xf32>
    %cst_13 = arith.constant 2.81022636E-8 : f32
    %60 = vector.broadcast %cst_13 : f32 to vector<16x128xf32>
    %61 = arith.mulf %60, %59 : vector<16x128xf32>
    %cst_14 = arith.constant 3.43273939E-7 : f32
    %62 = vector.broadcast %cst_14 : f32 to vector<16x128xf32>
    %63 = arith.addf %62, %61 : vector<16x128xf32>
    %64 = arith.mulf %63, %59 : vector<16x128xf32>
    %cst_15 = arith.constant -3.5233877E-6 : f32
    %65 = vector.broadcast %cst_15 : f32 to vector<16x128xf32>
    %66 = arith.addf %65, %64 : vector<16x128xf32>
    %67 = arith.mulf %66, %59 : vector<16x128xf32>
    %cst_16 = arith.constant -4.39150654E-6 : f32
    %68 = vector.broadcast %cst_16 : f32 to vector<16x128xf32>
    %69 = arith.addf %68, %67 : vector<16x128xf32>
    %70 = arith.mulf %69, %59 : vector<16x128xf32>
    %cst_17 = arith.constant 2.1858087E-4 : f32
    %71 = vector.broadcast %cst_17 : f32 to vector<16x128xf32>
    %72 = arith.addf %71, %70 : vector<16x128xf32>
    %73 = arith.mulf %72, %59 : vector<16x128xf32>
    %cst_18 = arith.constant -0.00125372503 : f32
    %74 = vector.broadcast %cst_18 : f32 to vector<16x128xf32>
    %75 = arith.addf %74, %73 : vector<16x128xf32>
    %76 = arith.mulf %75, %59 : vector<16x128xf32>
    %cst_19 = arith.constant -0.00417768164 : f32
    %77 = vector.broadcast %cst_19 : f32 to vector<16x128xf32>
    %78 = arith.addf %77, %76 : vector<16x128xf32>
    %79 = arith.mulf %78, %59 : vector<16x128xf32>
    %cst_20 = arith.constant 0.246640727 : f32
    %80 = vector.broadcast %cst_20 : f32 to vector<16x128xf32>
    %81 = arith.addf %80, %79 : vector<16x128xf32>
    %82 = arith.mulf %81, %59 : vector<16x128xf32>
    %cst_21 = arith.constant 1.50140941 : f32
    %83 = vector.broadcast %cst_21 : f32 to vector<16x128xf32>
    %84 = arith.addf %83, %82 : vector<16x128xf32>
    %85 = math.sqrt %57 : vector<16x128xf32>
    %cst_22 = arith.constant 3.000000e+00 : f32
    %86 = vector.broadcast %cst_22 : f32 to vector<16x128xf32>
    %87 = arith.subf %85, %86 : vector<16x128xf32>
    %cst_23 = arith.constant -2.00214257E-4 : f32
    %88 = vector.broadcast %cst_23 : f32 to vector<16x128xf32>
    %89 = arith.mulf %88, %87 : vector<16x128xf32>
    %cst_24 = arith.constant 1.00950558E-4 : f32
    %90 = vector.broadcast %cst_24 : f32 to vector<16x128xf32>
    %91 = arith.addf %90, %89 : vector<16x128xf32>
    %92 = arith.mulf %91, %87 : vector<16x128xf32>
    %cst_25 = arith.constant 0.00134934322 : f32
    %93 = vector.broadcast %cst_25 : f32 to vector<16x128xf32>
    %94 = arith.addf %93, %92 : vector<16x128xf32>
    %95 = arith.mulf %94, %87 : vector<16x128xf32>
    %cst_26 = arith.constant -0.00367342844 : f32
    %96 = vector.broadcast %cst_26 : f32 to vector<16x128xf32>
    %97 = arith.addf %96, %95 : vector<16x128xf32>
    %98 = arith.mulf %97, %87 : vector<16x128xf32>
    %cst_27 = arith.constant 0.00573950773 : f32
    %99 = vector.broadcast %cst_27 : f32 to vector<16x128xf32>
    %100 = arith.addf %99, %98 : vector<16x128xf32>
    %101 = arith.mulf %100, %87 : vector<16x128xf32>
    %cst_28 = arith.constant -0.0076224613 : f32
    %102 = vector.broadcast %cst_28 : f32 to vector<16x128xf32>
    %103 = arith.addf %102, %101 : vector<16x128xf32>
    %104 = arith.mulf %103, %87 : vector<16x128xf32>
    %cst_29 = arith.constant 0.00943887047 : f32
    %105 = vector.broadcast %cst_29 : f32 to vector<16x128xf32>
    %106 = arith.addf %105, %104 : vector<16x128xf32>
    %107 = arith.mulf %106, %87 : vector<16x128xf32>
    %cst_30 = arith.constant 1.00167406 : f32
    %108 = vector.broadcast %cst_30 : f32 to vector<16x128xf32>
    %109 = arith.addf %108, %107 : vector<16x128xf32>
    %110 = arith.mulf %109, %87 : vector<16x128xf32>
    %cst_31 = arith.constant 2.83297682 : f32
    %111 = vector.broadcast %cst_31 : f32 to vector<16x128xf32>
    %112 = arith.addf %111, %110 : vector<16x128xf32>
    %cst_32 = arith.constant 5.000000e+00 : f32
    %113 = vector.broadcast %cst_32 : f32 to vector<16x128xf32>
    %114 = arith.cmpf olt, %57, %113 : vector<16x128xf32>
    %115 = arith.select %114, %84, %112 : vector<16x128xi1>, vector<16x128xf32>
    %116 = arith.mulf %115, %49 : vector<16x128xf32>
    %cst_33 = arith.constant 1.41421354 : f32
    %117 = vector.broadcast %cst_33 : f32 to vector<16x128xf32>
    %118 = arith.mulf %117, %116 : vector<16x128xf32>
    %c0_34 = arith.constant 0 : index
    %c0_35 = arith.constant 0 : index
    %119 = vector.load %arg2[%c0_34, %c0_35] : memref<16x128xf32, #tpu.memory_space<vmem>>, vector<16x128xf32>
    %cst_36 = arith.constant 1.000000e-01 : f32
    %120 = vector.broadcast %cst_36 : f32 to vector<16x128xf32>
    %121 = arith.mulf %120, %118 : vector<16x128xf32>
    %cst_37 = arith.constant 1.000000e+00 : f32
    %122 = vector.broadcast %cst_37 : f32 to vector<16x128xf32>
    %123 = arith.addf %122, %121 : vector<16x128xf32>
    %124 = arith.mulf %119, %123 : vector<16x128xf32>
    %c0_38 = arith.constant 0 : index
    %c0_39 = arith.constant 0 : index
    %125 = vector.load %arg3[%c0_38, %c0_39] : memref<16x128xf32, #tpu.memory_space<vmem>>, vector<16x128xf32>
    tpu.vector_store %arg3[%c0_38, %c0_39], %124 {strides = array<i32>} : memref<16x128xf32, #tpu.memory_space<vmem>>, vector<16x128xf32>,
    return
  }
  func.func @transform_0(%arg0: i32, %arg1: memref<1xi32, #tpu.memory_space<smem>>) -> (i32, i32) {
    %c0_i32 = arith.constant 0 : i32
    %c0_i32_0 = arith.constant 0 : i32
    return %arg0, %c0_i32 : i32, i32
  }
  func.func @transform_1(%arg0: i32, %arg1: memref<1xi32, #tpu.memory_space<smem>>) -> (i32, i32) {
    %c0_i32 = arith.constant 0 : i32
    %c0_i32_0 = arith.constant 0 : i32
    return %arg0, %c0_i32 : i32, i32
  }
}

</mosaic_0001>

<llo_original>
// kernel: tpu_custom_call.1
$region0: #{tpu_custom_call.1}
  #allocation0 [shape = 'u32[]', space=smem, size = 0x4, offset = 0x4, fixed_abs, tag = 'smem constant byte address 0x4 - core index']
  #allocation1 [shape = 'u32[144,128]{1,0:T(1,128)}', space=vmem, size = 0x12000, scoped, tag = 'internal scratch']
  #allocation2 [shape = 's32[1]{0}', space=sflag, size = 0x4, scoped, tag = 'scoped memory for tpu_custom_call.1']
  #allocation3 [shape = 's32[1]{0:T(128)S(6)}', space=smem, size = 0x200, scoped, tag = 'prefetched SMEM operand 0']
  %s0 = inlined_call_operand.<no memory space> [shape: s32[1], index: 0, kind: input, shape index: {}]
  %s1 = inlined_call_operand.hbm [shape: f32[16,128], index: 1, kind: input, shape index: {}]
  %s2 = inlined_call_operand.hbm [shape: f32[16,128], index: 2, kind: output, shape index: {}]
  %s3 = sld [smem:[#allocation0]]
  $region18: #{tpu_custom_call.1} parent=0
    _
  %s5 = ssub.s32 1, %s3
  %s6 = scalar_select 0, %s5, %s3
  %7 = sst [smem:[#allocation3]] %s0
  $region1: #{tpu_custom_call.1} parent=0
    #allocation4 [shape = 'u8[8192]{0}', space=vmem, size = 0x2000, scoped, tag = 'input window, operand 1, single buffered']
    #allocation5 [shape = 's32[1]{0}', space=sflag, size = 0x4, scoped, tag = 'scoped memory for tpu_custom_call.1']
    #allocation6 [shape = 's32[1]{0}', space=sflag, size = 0x4, scoped, tag = 'scoped memory for tpu_custom_call.1']
    #allocation7 [shape = 'u8[8192]{0}', space=vmem, size = 0x2000, scoped, tag = 'output window, operand 0, single buffered']
    %8 = vsyncpa [#allocation5], 0
    %9 = vsyncpa [#allocation6], 0
    // Predicated region
    $region2: #{tpu_custom_call.1} parent=1 // pred_check
      _
    $region3: #{tpu_custom_call.1} parent=1 // pred_check_branch
      %11 = sbr.rel (0) target = $region5
    $region4: #{tpu_custom_call.1} parent=1 // pred_region
      %s13 = ssub.s32 256, 256
      %14 = vsyncadd [#allocation5], %s13
      %s15 = sshll.u32 [#allocation4], 4
      %s16 = int_to_ptr.vmem [resolvable:$true] %s15
      %21 = dma.hbm_to_vmem [thread:$0]  %s1, 256, %s16, [#allocation5], 128, 128, 8
    $region5: #{tpu_custom_call.1} parent=1 // pred_fallthru
      _
    // Predicated region
    $region6: #{tpu_custom_call.1} parent=1 // pred_check
      _
    $region7: #{tpu_custom_call.1} parent=1 // pred_check_branch
      %23 = sbr.rel (0) target = $region9
    $region8: #{tpu_custom_call.1} parent=1 // pred_region
      %24 = dma.done [#allocation5], 256
    $region9: #{tpu_custom_call.1} parent=1 // pred_fallthru
      _
    %v25 = vlaneseq
    %v26 = vshrl.u32 %v25, 7
    %v27 = vadd.s32 %v26, 8
    %v28 = vlaneseq
    %v29 = vand.u32 %v28, 127
    %s30 = smul.u32 0, 16
    %v31 = vstv %s30
    %v32 = vadd.s32 %v31, %v26
    %v33 = vadd.s32 %v31, %v27
    %v34 = vmul.u32 %v32, 128
    %v35 = vmul.u32 %v33, 128
    %v36 = vadd.s32 %v34, %v29
    %v37 = vadd.s32 %v35, %v29
    %s38 = sld [smem:[#allocation3]]
    %v39 = vmul.u32 %v36, 2654435769
    %v40 = vmul.u32 %v37, 2654435769
    %v41 = vstv %s38
    %v42 = vadd.s32 %v39, %v41
    %v43 = vadd.s32 %v40, %v41
    %v44 = vshrl.u32 %v42, 16
    %v45 = vshrl.u32 %v43, 16
    %v46 = vxor.u32 %v42, %v44
    %v47 = vxor.u32 %v43, %v45
    %v48 = vmul.u32 %v46, 2246822507
    %v49 = vmul.u32 %v47, 2246822507
    %v50 = vshrl.u32 %v48, 13
    %v51 = vshrl.u32 %v49, 13
    %v52 = vxor.u32 %v48, %v50
    %v53 = vxor.u32 %v49, %v51
    %v54 = vmul.u32 %v52, 3266489909
    %v55 = vmul.u32 %v53, 3266489909
    %v56 = vshrl.u32 %v54, 16
    %v57 = vshrl.u32 %v55, 16
    %v58 = vxor.u32 %v54, %v56
    %v59 = vxor.u32 %v55, %v57
    %s60 = smul.u32 %s38, 2246822507
    %s61 = sadd.s32 %s60, 2135587861
    %v62 = vstv %s61
    %v63 = vxor.u32 %v58, %v62
    %v64 = vxor.u32 %v59, %v62
    %v65 = vshrl.u32 %v63, 16
    %v66 = vshrl.u32 %v64, 16
    %v67 = vxor.u32 %v63, %v65
    %v68 = vxor.u32 %v64, %v66
    %v69 = vmul.u32 %v67, 2246822507
    %v70 = vmul.u32 %v68, 2246822507
    %v71 = vshrl.u32 %v69, 13
    %v72 = vshrl.u32 %v70, 13
    %v73 = vxor.u32 %v69, %v71
    %v74 = vxor.u32 %v70, %v72
    %v75 = vmul.u32 %v73, 3266489909
    %v76 = vmul.u32 %v74, 3266489909
    %v77 = vshrl.u32 %v75, 16
    %v78 = vshrl.u32 %v76, 16
    %v79 = vxor.u32 %v75, %v77
    %v80 = vxor.u32 %v76, %v78
    %v81 = vshrl.u32 %v79, 8
    %v82 = vshrl.u32 %v80, 8
    %v83 = vcvt.s32.f32 %v81
    %v84 = vcvt.s32.f32 %v82
    %v85 = vsub.f32 %v83, 8388607.5
    %v86 = vsub.f32 %v84, 8388607.5
    %v87 = vmul.f32 %v85, 1.1920929e-07
    %v88 = vmul.f32 %v86, 1.1920929e-07
    %v89 = vsub.f32 1.0, %v87
    %v90 = vsub.f32 1.0, %v88
    %v91 = vadd.f32 %v87, 1.0
    %v92 = vadd.f32 %v88, 1.0
    %v93 = vmul.f32 %v89, %v91
    %v94 = vmul.f32 %v90, %v92
    %v95 = vlog2.pop %v93
    %v96 = vmul.f32 %v95, 0.6931472
    %v97 = vlog2.pop %v94
    %v98 = vmul.f32 %v97, 0.6931472
    %v99 = vsub.f32 0.0, %v96
    %v100 = vsub.f32 0.0, %v98
    %v101 = vsub.f32 %v99, 2.5
    %v102 = vsub.f32 %v100, 2.5
    %v103 = vmul.f32 %v101, 2.8102264e-08
    %v104 = vmul.f32 %v102, 2.8102264e-08
    %v105 = vadd.f32 %v103, 3.4327394e-07
    %v106 = vadd.f32 %v104, 3.4327394e-07
    %v107 = vmul.f32 %v105, %v101
    %v108 = vmul.f32 %v106, %v102
    %v109 = vadd.f32 %v107, -3.5233877e-06
    %v110 = vadd.f32 %v108, -3.5233877e-06
    %v111 = vmul.f32 %v109, %v101
    %v112 = vmul.f32 %v110, %v102
    %v113 = vadd.f32 %v111, -4.3915065e-06
    %v114 = vadd.f32 %v112, -4.3915065e-06
    %v115 = vmul.f32 %v113, %v101
    %v116 = vmul.f32 %v114, %v102
    %v117 = vadd.f32 %v115, 0.00021858087
    %v118 = vadd.f32 %v116, 0.00021858087
    %v119 = vmul.f32 %v117, %v101
    %v120 = vmul.f32 %v118, %v102
    %v121 = vadd.f32 %v119, -0.001253725
    %v122 = vadd.f32 %v120, -0.001253725
    %v123 = vmul.f32 %v121, %v101
    %v124 = vmul.f32 %v122, %v102
    %v125 = vadd.f32 %v123, -0.0041776816
    %v126 = vadd.f32 %v124, -0.0041776816
    %v127 = vmul.f32 %v125, %v101
    %v128 = vmul.f32 %v126, %v102
    %v129 = vadd.f32 %v127, 0.24664073
    %v130 = vadd.f32 %v128, 0.24664073
    %v131 = vmul.f32 %v129, %v101
    %v132 = vmul.f32 %v130, %v102
    %v133 = vadd.f32 %v131, 1.5014094
    %v134 = vadd.f32 %v132, 1.5014094
    %v135 = vrsqrt.pop %v99
    %v136 = vmul.f32 %v99, %v135
    %vm137 = vcmp.eq.f32.partialorder %v99, inf
    %v138 = vsel %vm137, %v99, %v136
    %vm139 = vcmp.eq.f32.partialorder %v99, 0.0
    %v140 = vand.u32 %v99, 2147483648
    %v141 = vsel %vm139, %v140, %v138
    %v142 = vrsqrt.pop %v100
    %v143 = vmul.f32 %v100, %v142
    %vm144 = vcmp.eq.f32.partialorder %v100, inf
    %v145 = vsel %vm144, %v100, %v143
    %vm146 = vcmp.eq.f32.partialorder %v100, 0.0
    %v147 = vand.u32 %v100, 2147483648
    %v148 = vsel %vm146, %v147, %v145
    %v149 = vsub.f32 %v141, 3.0
    %v150 = vsub.f32 %v148, 3.0
    %v151 = vmul.f32 %v149, -0.00020021426
    %v152 = vmul.f32 %v150, -0.00020021426
    %v153 = vadd.f32 %v151, 0.00010095056
    %v154 = vadd.f32 %v152, 0.00010095056
    %v155 = vmul.f32 %v153, %v149
    %v156 = vmul.f32 %v154, %v150
    %v157 = vadd.f32 %v155, 0.0013493432
    %v158 = vadd.f32 %v156, 0.0013493432
    %v159 = vmul.f32 %v157, %v149
    %v160 = vmul.f32 %v158, %v150
    %v161 = vadd.f32 %v159, -0.0036734284
    %v162 = vadd.f32 %v160, -0.0036734284
    %v163 = vmul.f32 %v161, %v149
    %v164 = vmul.f32 %v162, %v150
    %v165 = vadd.f32 %v163, 0.0057395077
    %v166 = vadd.f32 %v164, 0.0057395077
    %v167 = vmul.f32 %v165, %v149
    %v168 = vmul.f32 %v166, %v150
    %v169 = vadd.f32 %v167, -0.0076224613
    %v170 = vadd.f32 %v168, -0.0076224613
    %v171 = vmul.f32 %v169, %v149
    %v172 = vmul.f32 %v170, %v150
    %v173 = vadd.f32 %v171, 0.0094388705
    %v174 = vadd.f32 %v172, 0.0094388705
    %v175 = vmul.f32 %v173, %v149
    %v176 = vmul.f32 %v174, %v150
    %v177 = vadd.f32 %v175, 1.001674
    %v178 = vadd.f32 %v176, 1.001674
    %v179 = vmul.f32 %v177, %v149
    %v180 = vmul.f32 %v178, %v150
    %v181 = vadd.f32 %v179, 2.8329768
    %v182 = vadd.f32 %v180, 2.8329768
    %vm183 = vcmp.lt.f32.partialorder %v99, 5.0
    %vm184 = vcmp.lt.f32.partialorder %v100, 5.0
    %v185 = vsel %vm183, %v133, %v181
    %v186 = vsel %vm184, %v134, %v182
    %v187 = vmul.f32 %v185, %v87
    %v188 = vmul.f32 %v186, %v88
    %v189 = vmul.f32 %v187, 1.4142135
    %v190 = vmul.f32 %v188, 1.4142135
    %v191 = vld [vmem:[#allocation4] sm:$0xff]
    %v192 = vld [vmem:[#allocation4 + $0x8] sm:$0xff]
    %v193 = vmul.f32 %v189, 0.1
    %v194 = vmul.f32 %v190, 0.1
    %v195 = vadd.f32 %v193, 1.0
    %v196 = vadd.f32 %v194, 1.0
    %v197 = vmul.f32 %v191, %v195
    %v198 = vmul.f32 %v192, %v196
    %199 = vst [vmem:[#allocation7] sm:$0xff] %v197
    %200 = vst [vmem:[#allocation7 + $0x8] sm:$0xff] %v198
    // Predicated region
    $region10: #{tpu_custom_call.1} parent=1 // pred_check
      _
    $region11: #{tpu_custom_call.1} parent=1 // pred_check_branch
      %202 = sbr.rel (0) target = $region13
    $region12: #{tpu_custom_call.1} parent=1 // pred_region
      %s204 = ssub.s32 256, 256
      %205 = vsyncadd [#allocation6], %s204
      %s206 = sshll.u32 [#allocation7], 4
      %s207 = int_to_ptr.vmem [resolvable:$true] %s206
      %212 = dma.vmem_to_hbm [thread:$0]  %s207, 256, %s2, [#allocation6], 128, 128, 8
    $region13: #{tpu_custom_call.1} parent=1 // pred_fallthru
      _
    // Predicated region
    $region14: #{tpu_custom_call.1} parent=1 // pred_check
      _
    $region15: #{tpu_custom_call.1} parent=1 // pred_check_branch
      %214 = sbr.rel (0) target = $region17
    $region16: #{tpu_custom_call.1} parent=1 // pred_region
      %215 = dma.done [#allocation6], 256
    $region17: #{tpu_custom_call.1} parent=1 // pred_fallthru
      _
    %216 = vsyncpa [#allocation5], 1
    %217 = vsyncpa [#allocation6], 1

</llo_original>
